<compile_context>
chip_gen: v5e
topology: v5e:2x2
jax: 0.10.0
libtpu: 0.0.40
codegen_flags: <defaults>
</compile_context>

<pallas_src>
import functools

import jax
import jax.numpy as jnp
import numpy as np
from jax.experimental import pallas as pl
from jax.experimental.pallas import tpu as pltpu


def _cheb_kernel(x_ref, tt_ref, m_ref, o_ref, *, K, N):
    """One batch per grid step.

    x_ref:   (1, N, F_in*T)          graph signal slab (lane dim = F_in*T)
    tt_ref:  (K*N, N)                stacked transposed Chebyshev polys, row k*N+n = T_k[:, n]
    m_ref:   (K, F_in*T, F_out*T)    M_k = kron(scale * W_k, I_T)
    o_ref:   (1, N, F_out*T)         output slab (lane dim = F_out*T)
    """
    xg = x_ref[0]                                                        # (N, F_in*T)

    # Stage 1: all K node-mixings fused into ONE MXU matmul (contraction dim = N).
    r = jnp.dot(tt_ref[...], xg, preferred_element_type=jnp.float32)     # (K*N, F_in*T) f32

    # Stage 2: K MXU matmuls on static row slices of r; f32 accumulation in values
    # (no VMEM-scratch read-modify-write per k), then one lane-dense store.
    acc = jnp.dot(r[0:N, :].astype(m_ref.dtype), m_ref[0],
                  preferred_element_type=jnp.float32)                    # (N, F_out*T)
    for k in range(1, K):  # K is small and static -> unrolled.
        rk = r[k * N:(k + 1) * N, :].astype(m_ref.dtype)                 # (N, F_in*T)
        acc = acc + jnp.dot(rk, m_ref[k], preferred_element_type=jnp.float32)

    o_ref[0] = jnp.maximum(acc, 0.0).astype(o_ref.dtype)


def cheb_interpolation_conv(x, cheb_polynomials, cheb_poly_xj, gamma, *, use_bf16=False):
    """
    :param x:                 (B, N, F_in, T)  float32
    :param cheb_polynomials:  (K, N, N)        float32
    :param cheb_poly_xj:      (K, K)           float32  (indexed [j, k])
    :param gamma:             (K, F_in, F_out) float32
    :param use_bf16:          feed bf16 operands to the MXU (f32 accumulation)
    :return:                  (B, N, F_out, T) float32
    """
    B, N, F_in, T = x.shape
    K = cheb_polynomials.shape[0]
    F_out = gamma.shape[-1]
    out_dtype = x.dtype
    scale = 2.0 / (K + 1)

    # Interpolated weights with the ReLU-compatible scale folded in:
    #   W_k = scale * sum_j Gamma[j] * cheb_poly_xj[j, k]            -> (K, F_in, F_out)
    w = jnp.einsum("jk,jio->kio", cheb_poly_xj, gamma) * scale
    # Stage-2 operators M_k = kron(W_k, I_T): (K, F_in*T, F_out*T); keeps T on lanes.
    eye_t = jnp.eye(T, dtype=w.dtype)
    m_op = (w[:, :, None, :, None] * eye_t[None, None, :, None, :]).reshape(
        K, F_in * T, F_out * T)

    # One-time transpose + stack of the polynomials: Tt[k*N + n, m] = T_k[m, n].
    tt = jnp.transpose(cheb_polynomials, (0, 2, 1)).reshape(K * N, N)

    # Free reshape (contiguous collapse) -- NOT a transpose.
    xf = x.reshape(B, N, F_in * T)

    if use_bf16:
        xf = xf.astype(jnp.bfloat16)
        tt = tt.astype(jnp.bfloat16)
        m_op = m_op.astype(jnp.bfloat16)

    itemsize = 2 if use_bf16 else 4
    operand_bytes = (N * F_in * T + K * N * N + K * (F_in * T) * (F_out * T)
                     + N * F_out * T) * itemsize
    inter_bytes = (K * N * F_in * T + 2 * N * F_out * T) * 4
    # Double-buffered operands + f32 intermediates + headroom; capped at 64 MiB so the
    # same setting is valid on v5e/v6e (128 MiB VMEM) and v7x (64 MiB per TC).
    vmem_bytes = int(min(64 * 2**20,
                         max(32 * 2**20, 3 * operand_bytes + 2 * inter_bytes + (4 << 20))))

    kernel = functools.partial(_cheb_kernel, K=K, N=N)

    out_flat = pl.pallas_call(
        kernel,
        out_shape=jax.ShapeDtypeStruct((B, N, F_out * T), out_dtype),
        grid_spec=pltpu.PrefetchScalarGridSpec(
            num_scalar_prefetch=0,
            grid=(B,),
            in_specs=[
                pl.BlockSpec((1, N, F_in * T), lambda b: (b, 0, 0)),
                pl.BlockSpec((K * N, N), lambda b: (0, 0)),
                pl.BlockSpec((K, F_in * T, F_out * T), lambda b: (0, 0, 0)),
            ],
            out_specs=pl.BlockSpec((1, N, F_out * T), lambda b: (b, 0, 0)),
        ),
        compiler_params=pltpu.CompilerParams(
            dimension_semantics=("parallel",),
            vmem_limit_bytes=vmem_bytes,
        ),
    )(xf, tt, m_op)

    # Free reshape back to the PyTorch layout (B, N, F_out, T).
    return out_flat.reshape(B, N, F_out, T)


def _reference(x, cheb_polynomials, cheb_poly_xj, gamma):
    """Pure-JAX reference mirroring the PyTorch loop nest."""
    B, N, F_in, T = x.shape
    K = cheb_polynomials.shape[0]
    F_out = gamma.shape[-1]
    outs = []
    for t in range(T):
        gs = x[:, :, :, t]                                   # (B, N, F_in)
        out = jnp.zeros((B, N, F_out), jnp.float32)
        for k in range(K):
            Tk = cheb_polynomials[k]
            rhs = jnp.einsum("bmf,mn->bnf", gs, Tk)
            lhs = jnp.zeros((F_in, F_out), jnp.float32)
            for j in range(K):
                lhs = lhs + gamma[j] * cheb_poly_xj[j, k]
            out = out + jnp.einsum("bnf,fo->bno", rhs, lhs)
        outs.append(out[..., None])
    return jax.nn.relu(2.0 / (K + 1) * jnp.concatenate(outs, axis=-1))


if __name__ == "__main__":
    # Small, deterministic problem.
    B, N, F_in, F_out, T, K = 2, 16, 4, 8, 8, 3

    key = jax.random.PRNGKey(0)
    kx, kp, kc, kg = jax.random.split(key, 4)

    x = jax.random.normal(kx, (B, N, F_in, T), dtype=jnp.float32)
    cheb_polynomials = jax.random.normal(kp, (K, N, N), dtype=jnp.float32)
    cheb_poly_xj = jax.random.normal(kc, (K, K), dtype=jnp.float32)
    gamma = jax.random.normal(kg, (K, F_in, F_out), dtype=jnp.float32) * 0.1

    out = jax.block_until_ready(
        cheb_interpolation_conv(x, cheb_polynomials, cheb_poly_xj, gamma)
    )

    ref = jax.block_until_ready(_reference(x, cheb_polynomials, cheb_poly_xj, gamma))
    assert out.shape == (B, N, F_out, T), out.shape
    np.testing.assert_allclose(np.asarray(out), np.asarray(ref), rtol=1e-4, atol=1e-4)

    print("KERNEL_OK")
</pallas_src>

<mosaic_0001>
module attributes {stable_mosaic.version = 11 : i64} {
  func.func @_cheb_kernel(%arg0: i32, %arg1: memref<1x16x32xf32, #tpu.memory_space<vmem>>, %arg2: memref<48x16xf32, #tpu.memory_space<vmem>>, %arg3: memref<3x32x64xf32, #tpu.memory_space<vmem>>, %arg4: memref<1x16x64xf32, #tpu.memory_space<vmem>>) attributes {dimension_semantics = [#tpu.dimension_semantics<parallel>], iteration_bounds = array<i64: 2>, scalar_prefetch = 0 : i64, scratch_operands = 0 : i64, tpu.core_type = #tpu.core_type<tc>, window_params = [{transform_indices = @transform_0, window_bounds = array<i64: 1, 16, 32>}, {pipeline_mode = #tpu.pipeline_mode<synchronous>, transform_indices = @transform_1, window_bounds = array<i64: 48, 16>}, {pipeline_mode = #tpu.pipeline_mode<synchronous>, transform_indices = @transform_2, window_bounds = array<i64: 3, 32, 64>}, {transform_indices = @transform_3, window_bounds = array<i64: 1, 16, 64>}]} {
    %c0 = arith.constant 0 : index
    %c0_0 = arith.constant 0 : index
    %c0_1 = arith.constant 0 : index
    %0 = vector.load %arg1[%c0, %c0_0, %c0_1] : memref<1x16x32xf32, #tpu.memory_space<vmem>>, vector<1x16x32xf32>
    %1 = vector.shape_cast %0 : vector<1x16x32xf32> to vector<16x32xf32>
    %c0_2 = arith.constant 0 : index
    %c0_3 = arith.constant 0 : index
    %2 = vector.load %arg2[%c0_2, %c0_3] : memref<48x16xf32, #tpu.memory_space<vmem>>, vector<48x16xf32>
    %cst = arith.constant dense<0.000000e+00> : vector<48x32xf32>
    %3 = tpu.matmul %2, %1, %cst {dimension_numbers = #tpu.dot_dimension_numbers<[1], [0], [0], [1], [0, 0, 1, 1], [], []>} : vector<48x16xf32>, vector<16x32xf32>, vector<48x32xf32> -> vector<48x32xf32>
    %4 = vector.extract_strided_slice %3 {offsets = [0, 0], sizes = [16, 32], strides = [1, 1]} : vector<48x32xf32> to vector<16x32xf32>
    %c0_4 = arith.constant 0 : index
    %c0_5 = arith.constant 0 : index
    %c0_6 = arith.constant 0 : index
    %5 = vector.load %arg3[%c0_4, %c0_5, %c0_6] : memref<3x32x64xf32, #tpu.memory_space<vmem>>, vector<1x32x64xf32>
    %6 = vector.shape_cast %5 : vector<1x32x64xf32> to vector<32x64xf32>
    %cst_7 = arith.constant dense<0.000000e+00> : vector<16x64xf32>
    %7 = tpu.matmul %4, %6, %cst_7 {dimension_numbers = #tpu.dot_dimension_numbers<[1], [0], [0], [1], [0, 0, 1, 1], [], []>} : vector<16x32xf32>, vector<32x64xf32>, vector<16x64xf32> -> vector<16x64xf32>
    %8 = vector.extract_strided_slice %3 {offsets = [16, 0], sizes = [16, 32], strides = [1, 1]} : vector<48x32xf32> to vector<16x32xf32>
    %c1 = arith.constant 1 : index
    %c0_8 = arith.constant 0 : index
    %c0_9 = arith.constant 0 : index
    %9 = vector.load %arg3[%c1, %c0_8, %c0_9] : memref<3x32x64xf32, #tpu.memory_space<vmem>>, vector<1x32x64xf32>
    %10 = vector.shape_cast %9 : vector<1x32x64xf32> to vector<32x64xf32>
    %cst_10 = arith.constant dense<0.000000e+00> : vector<16x64xf32>
    %11 = tpu.matmul %8, %10, %cst_10 {dimension_numbers = #tpu.dot_dimension_numbers<[1], [0], [0], [1], [0, 0, 1, 1], [], []>} : vector<16x32xf32>, vector<32x64xf32>, vector<16x64xf32> -> vector<16x64xf32>
    %12 = arith.addf %7, %11 : vector<16x64xf32>
    %13 = vector.extract_strided_slice %3 {offsets = [32, 0], sizes = [16, 32], strides = [1, 1]} : vector<48x32xf32> to vector<16x32xf32>
    %c2 = arith.constant 2 : index
    %c0_11 = arith.constant 0 : index
    %c0_12 = arith.constant 0 : index
    %14 = vector.load %arg3[%c2, %c0_11, %c0_12] : memref<3x32x64xf32, #tpu.memory_space<vmem>>, vector<1x32x64xf32>
    %15 = vector.shape_cast %14 : vector<1x32x64xf32> to vector<32x64xf32>
    %cst_13 = arith.constant dense<0.000000e+00> : vector<16x64xf32>
    %16 = tpu.matmul %13, %15, %cst_13 {dimension_numbers = #tpu.dot_dimension_numbers<[1], [0], [0], [1], [0, 0, 1, 1], [], []>} : vector<16x32xf32>, vector<32x64xf32>, vector<16x64xf32> -> vector<16x64xf32>
    %17 = arith.addf %12, %16 : vector<16x64xf32>
    %cst_14 = arith.constant 0.000000e+00 : f32
    %18 = vector.broadcast %cst_14 : f32 to vector<16x64xf32>
    %19 = arith.maximumf %17, %18 : vector<16x64xf32>
    %c0_15 = arith.constant 0 : index
    %c0_16 = arith.constant 0 : index
    %c0_17 = arith.constant 0 : index
    %20 = vector.load %arg4[%c0_15, %c0_16, %c0_17] : memref<1x16x64xf32, #tpu.memory_space<vmem>>, vector<1x16x64xf32>
    %21 = vector.shape_cast %20 : vector<1x16x64xf32> to vector<16x64xf32>
    %22 = vector.shape_cast %19 : vector<16x64xf32> to vector<1x16x64xf32>
    tpu.vector_store %arg4[%c0_15, %c0_16, %c0_17], %22 {strides = array<i32>} : memref<1x16x64xf32, #tpu.memory_space<vmem>>, vector<1x16x64xf32>,
    return
  }
  func.func @transform_0(%arg0: i32) -> (i32, i32, i32) {
    %c0_i32 = arith.constant 0 : i32
    %c0_i32_0 = arith.constant 0 : i32
    %c0_i32_1 = arith.constant 0 : i32
    return %arg0, %c0_i32, %c0_i32_0 : i32, i32, i32
  }
  func.func @transform_1(%arg0: i32) -> (i32, i32) {
    %c0_i32 = arith.constant 0 : i32
    %c0_i32_0 = arith.constant 0 : i32
    %c0_i32_1 = arith.constant 0 : i32
    return %c0_i32, %c0_i32_0 : i32, i32
  }
  func.func @transform_2(%arg0: i32) -> (i32, i32, i32) {
    %c0_i32 = arith.constant 0 : i32
    %c0_i32_0 = arith.constant 0 : i32
    %c0_i32_1 = arith.constant 0 : i32
    %c0_i32_2 = arith.constant 0 : i32
    return %c0_i32, %c0_i32_0, %c0_i32_1 : i32, i32, i32
  }
  func.func @transform_3(%arg0: i32) -> (i32, i32, i32) {
    %c0_i32 = arith.constant 0 : i32
    %c0_i32_0 = arith.constant 0 : i32
    %c0_i32_1 = arith.constant 0 : i32
    return %arg0, %c0_i32, %c0_i32_0 : i32, i32, i32
  }
}

</mosaic_0001>

<llo_original>
// kernel: tpu_custom_call.1
$region0: #{tpu_custom_call.1}
  #allocation0 [shape = 'u32[]', space=smem, size = 0x4, offset = 0x4, fixed_abs, tag = 'smem constant byte address 0x4 - core index']
  #allocation1 [shape = 'u32[72,128]{1,0:T(1,128)}', space=vmem, size = 0x9000, scoped, tag = 'internal scratch']
  %s0 = inlined_call_operand.vmem [shape: f32[2,16,32], index: 0, kind: input, shape index: {}]
  %s1 = inlined_call_operand.vmem [shape: f32[48,16], index: 1, kind: input, shape index: {}]
  %s2 = inlined_call_operand.hbm [shape: f32[3,32,64], index: 2, kind: input, shape index: {}]
  %s3 = inlined_call_operand.hbm [shape: f32[2,16,64], index: 3, kind: output, shape index: {}]
  %s4 = sld [smem:[#allocation0]]
  $region49: #{tpu_custom_call.1} parent=0
    _
  %s6 = ssub.s32 1, %s4
  %s7 = scalar_select 0, %s6, %s4
  $region1: #{tpu_custom_call.1} parent=0
    #allocation2 [shape = 'u8[49152]{0}', space=vmem, size = 0xc000, scoped, tag = 'input window, operand 2, single buffered']
    #allocation3 [shape = 's32[2]{0}', space=sflag, size = 0x8, scoped, tag = 'scoped memory for tpu_custom_call.1']
    #allocation4 [shape = 's32[2]{0}', space=sflag, size = 0x8, scoped, tag = 'scoped memory for tpu_custom_call.1']
    #allocation5 [shape = 'u8[16384]{0}', space=vmem, size = 0x4000, scoped, tag = 'output window, operand 0']
    %8 = vsyncpa [#allocation3], 0
    %9 = vsyncpa [#allocation4], 0
    %s10 = scalar_lea.sflag [#allocation4], 1
    %11 = vsyncpa %s10, 0
    loop: start=0, step=1, limit=4
    $region2: #{tpu_custom_call.1} parent=1 // loop_pre_header
      _
    $region3: #{tpu_custom_call.1} parent=1 // loop_header
      %s13 = sphi 0, %s17
      %p14 = scmp.ge.s32.totalorder %s13, 4
      %s23 = sphi 0, %s25
      %s26 = sphi 0, %s23
      %s27 = sphi 0, %s26
      %s43 = sphi 0, %s27
      %s47 = sphi 0, %s47
      %s49 = sphi 0, %s47
      %s50 = sphi 0, %s49
      %s64 = sphi 0, %s50
      %s68 = sphi 0, %s68
      %s70 = sphi 0, %s68
      %s71 = sphi 0, %s70
      %s85 = sphi 0, %s71
      %s91 = sphi 0, %s93
      %s94 = sphi 0, %s91
      %s95 = sphi 0, %s94
      %s111 = sphi 0, %s95
    $region4: #{tpu_custom_call.1} parent=1 // loop_header_branch
      %16 = sbr.rel (%p14) target = $region8
    $region5: #{tpu_custom_call.1} parent=1 // loop_body
      %s18 = ssub.s32 %s13, 1
      %s19 = ssub.s32 %s13, 2
      %s20 = sadd.s32 %s13, 1
      %s21 = ssub.s32 %s13, %s20
      %p22 = scmp.eq.s32.totalorder %s21, 0
      %s24 = sadd.s32 %s23, 1
      %s25 = scalar_select %p22, %s23, %s24
      %p28 = pneg %p22
      %p29 = scmp.eq.s32.totalorder %s13, 1
      %p30 = por %p28, %p29
      %p31 = scmp.ne.s32.totalorder %s23, %s26
      %p32 = scmp.eq.s32.totalorder %s13, 0
      %p33 = por %p31, %p32
      %p34 = scmp.ne.s32.totalorder %s23, %s26
      %p35 = scmp.eq.s32.totalorder %s18, 1
      %p36 = por %p34, %p35
      %p37 = scmp.ne.s32.totalorder %s26, %s27
      %p38 = scmp.eq.s32.totalorder %s18, 0
      %p39 = por %p37, %p38
      %p40 = scmp.ne.s32.totalorder %s26, %s27
      %p41 = scmp.eq.s32.totalorder %s19, 1
      %p42 = por %p40, %p41
      %p44 = scmp.ne.s32.totalorder %s27, %s43
      %p45 = scmp.eq.s32.totalorder %s19, 0
      %p46 = por %p44, %p45
      %s48 = sadd.s32 %s47, 1
      %p51 = scmp.eq.s32.totalorder %s13, 1
      %p52 = scmp.ne.s32.totalorder %s47, %s49
      %p53 = scmp.eq.s32.totalorder %s13, 0
      %p54 = por %p52, %p53
      %p55 = scmp.ne.s32.totalorder %s47, %s49
      %p56 = scmp.eq.s32.totalorder %s18, 1
      %p57 = por %p55, %p56
      %p58 = scmp.ne.s32.totalorder %s49, %s50
      %p59 = scmp.eq.s32.totalorder %s18, 0
      %p60 = por %p58, %p59
      %p61 = scmp.ne.s32.totalorder %s49, %s50
      %p62 = scmp.eq.s32.totalorder %s19, 1
      %p63 = por %p61, %p62
      %p65 = scmp.ne.s32.totalorder %s50, %s64
      %p66 = scmp.eq.s32.totalorder %s19, 0
      %p67 = por %p65, %p66
      %s69 = sadd.s32 %s68, 1
      %p72 = scmp.eq.s32.totalorder %s13, 1
      %p73 = scmp.ne.s32.totalorder %s68, %s70
      %p74 = scmp.eq.s32.totalorder %s13, 0
      %p75 = por %p73, %p74
      %p76 = scmp.ne.s32.totalorder %s68, %s70
      %p77 = scmp.eq.s32.totalorder %s18, 1
      %p78 = por %p76, %p77
      %p79 = scmp.ne.s32.totalorder %s70, %s71
      %p80 = scmp.eq.s32.totalorder %s18, 0
      %p81 = por %p79, %p80
      %p82 = scmp.ne.s32.totalorder %s70, %s71
      %p83 = scmp.eq.s32.totalorder %s19, 1
      %p84 = por %p82, %p83
      %p86 = scmp.ne.s32.totalorder %s71, %s85
      %p87 = scmp.eq.s32.totalorder %s19, 0
      %p88 = por %p86, %p87
      %s89 = ssub.s32 %s13, %s20
      %p90 = scmp.eq.s32.totalorder %s89, 0
      %s92 = sadd.s32 %s91, 1
      %s93 = scalar_select %p90, %s91, %s92
      %p96 = pneg %p90
      %p97 = scmp.eq.s32.totalorder %s13, 1
      %p98 = por %p96, %p97
      %p99 = scmp.ne.s32.totalorder %s91, %s94
      %p100 = scmp.eq.s32.totalorder %s13, 0
      %p101 = por %p99, %p100
      %p102 = scmp.ne.s32.totalorder %s91, %s94
      %p103 = scmp.eq.s32.totalorder %s18, 1
      %p104 = por %p102, %p103
      %p105 = scmp.ne.s32.totalorder %s94, %s95
      %p106 = scmp.eq.s32.totalorder %s18, 0
      %p107 = por %p105, %p106
      %p108 = scmp.ne.s32.totalorder %s94, %s95
      %p109 = scmp.eq.s32.totalorder %s19, 1
      %p110 = por %p108, %p109
      %p112 = scmp.ne.s32.totalorder %s95, %s111
      %p113 = scmp.eq.s32.totalorder %s19, 0
      %p114 = por %p112, %p113
      %p115 = scmp.le.s32.totalorder 1, %s13
      %p116 = scmp.lt.s32.totalorder %s13, 3
      %p117 = pnand %p115, %p116
      %p118 = pneg %p117
      // Predicated region
      $region9: #{tpu_custom_call.1} parent=5 // pred_check
        _
      $region10: #{tpu_custom_call.1} parent=5 // pred_check_branch
        %120 = sbr.rel (%p117) target = $region12
      $region11: #{tpu_custom_call.1} parent=5 // pred_region
        %s121 = ssub.s32 %s13, 1
        // Predicated region
        $region13: #{tpu_custom_call.1} parent=11 // pred_check
          %p122 = pneg %p60
        $region14: #{tpu_custom_call.1} parent=11 // pred_check_branch
          %124 = sbr.rel (%p122) target = $region16
        $region15: #{tpu_custom_call.1} parent=11 // pred_region
          _
        $region16: #{tpu_custom_call.1} parent=11 // pred_fallthru
          _
        // Predicated region
        $region17: #{tpu_custom_call.1} parent=11 // pred_check
          %p125 = pneg %p81
        $region18: #{tpu_custom_call.1} parent=11 // pred_check_branch
          %127 = sbr.rel (%p125) target = $region20
        $region19: #{tpu_custom_call.1} parent=11 // pred_region
          %129 = vsyncadd [#allocation3], 0
          %s130 = sshll.u32 %s2, 4
          %s131 = int_to_ptr.hbm [resolvable:$true] %s130
          %s132 = sshll.u32 [#allocation2], 4
          %s133 = int_to_ptr.vmem [resolvable:$true] %s132
          %138 = dma.hbm_to_vmem [thread:$0]  %s131, 1536, %s133, [#allocation3], 128, 128, 8
        $region20: #{tpu_custom_call.1} parent=11 // pred_fallthru
          _
      $region12: #{tpu_custom_call.1} parent=5 // pred_fallthru
        _
      %p139 = scmp.lt.s32.totalorder %s13, 2
      // Predicated region
      $region21: #{tpu_custom_call.1} parent=5 // pred_check
        %p140 = pneg %p139
      $region22: #{tpu_custom_call.1} parent=5 // pred_check_branch
        %142 = sbr.rel (%p140) target = $region24
      $region23: #{tpu_custom_call.1} parent=5 // pred_region
        // Predicated region
        $region25: #{tpu_custom_call.1} parent=23 // pred_check
          %p143 = pneg %p33
        $region26: #{tpu_custom_call.1} parent=23 // pred_check_branch
          %145 = sbr.rel (%p143) target = $region28
        $region27: #{tpu_custom_call.1} parent=23 // pred_region
          %p146 = scmp.lt.s32.totalorder %s13, 1
          %s147 = scalar_select %p146, %s13, 1
          %s148 = smul.addr %s147, 2
          %s149 = smul.addr %s148, 8
          %s150 = scalar_lea.vmem %s0, %s149
        $region28: #{tpu_custom_call.1} parent=23 // pred_fallthru
          _
      $region24: #{tpu_custom_call.1} parent=5 // pred_fallthru
        _
      %p151 = scmp.le.s32.totalorder 1, %s13
      %p152 = scmp.lt.s32.totalorder %s13, 3
      %p153 = pnand %p151, %p152
      %p154 = pneg %p153
      // Predicated region
      $region29: #{tpu_custom_call.1} parent=5 // pred_check
        _
      $region30: #{tpu_custom_call.1} parent=5 // pred_check_branch
        %156 = sbr.rel (%p153) target = $region32
      $region31: #{tpu_custom_call.1} parent=5 // pred_region
        %s157 = ssub.s32 %s13, 1
        // Predicated region
        $region33: #{tpu_custom_call.1} parent=31 // pred_check
          %p158 = pneg %p81
        $region34: #{tpu_custom_call.1} parent=31 // pred_check_branch
          %160 = sbr.rel (%p158) target = $region36
        $region35: #{tpu_custom_call.1} parent=31 // pred_region
          %162 = dma.done [#allocation3], 1536
        $region36: #{tpu_custom_call.1} parent=31 // pred_fallthru
          _
        %p163 = scmp.lt.s32.totalorder %s18, 1
        %s164 = scalar_select %p163, %s18, 1
        %s165 = smul.addr %s164, 2
        %s166 = smul.addr %s165, 8
        %s167 = scalar_lea.vmem %s0, %s166
        %p168 = pneg %p39
        %p169 = pneg %p36
        %p170 = pneg %p60
        %p171 = pneg %p57
        %p172 = pneg %p81
        %p173 = pneg %p78
        %p174 = pneg %p107
        %p175 = pneg %p104
        %s176 = sand.u32 %s94, 1
        %s177 = scalar_lea.sflag [#allocation4], %s176
        %s178 = sand.u32 %s94, 1
        %s179 = smul.addr %s178, 16
        %s180 = scalar_lea.vmem [#allocation5], %s179
        %p181 = scmp.lt.s32.totalorder %s18, 1
        %s182 = scalar_select %p181, %s18, 1
        %s183 = smul.addr %s182, 2
        %s184 = smul.addr %s183, 8
        %s185 = scalar_lea.vmem %s0, %s184
        %v186 = vld [vmem:[%s185] sm:$0xff]
        %v187 = vld [vmem:[%s185 + $0x8] sm:$0xff]
        %v188 = vld [vmem:[%s1] sm:$0xff]
        %v189 = vld [vmem:[%s1 + $0x8] sm:$0xff]
        %v190 = vld [vmem:[%s1 + $0x10] sm:$0xff]
        %v191 = vld [vmem:[%s1 + $0x18] sm:$0xff]
        %v192 = vld [vmem:[%s1 + $0x20] sm:$0xff]
        %v193 = vld [vmem:[%s1 + $0x28] sm:$0xff]
        %vm194 = vcmask 130048
        %v196 = vsel %vm194, %v188, 0
        %v199 = vsel %vm194, %v189, 0
        %v202 = vsel %vm194, %v190, 0
        %v205 = vsel %vm194, %v191, 0
        %v208 = vsel %vm194, %v192, 0
        %v211 = vsel %vm194, %v193, 0
        %213 = vmatpush.msra.mxu0 0.0
        %214 = vmatpush.msra.mxu0 0.0
        %215 = vmatpush.msra.mxu0 0.0
        %216 = vmatpush.msra.mxu0 0.0
        %217 = vmatpush.msra.mxu0 0.0
        %218 = vmatpush.msra.mxu0 0.0
        %219 = vmatpush.msra.mxu0 0.0
        %220 = vmatpush.msra.mxu0 0.0
        %221 = vmatpush.msra.mxu0 0.0
        %222 = vmatpush.msra.mxu0 0.0
        %223 = vmatpush.msra.mxu0 0.0
        %224 = vmatpush.msra.mxu0 0.0
        %225 = vmatpush.msra.mxu0 0.0
        %226 = vmatpush.msra.mxu0 0.0
        %227 = vmatpush.msra.mxu0 %v187
        %228 = vmatpush.msra.mxu0 %v186
        %229 = vmatmul.f32.gmra.mxu0 %v196
        %v230 = vpop.f32.mrf.mxu0
        %v231 = vadd.f32 0.0, %v230
        %232 = vmatmul.f32.gmra.mxu0 %v199
        %v233 = vpop.f32.mrf.mxu0
        %v234 = vadd.f32 0.0, %v233
        %235 = vmatmul.f32.gmra.mxu0 %v202
        %v236 = vpop.f32.mrf.mxu0
        %v237 = vadd.f32 0.0, %v236
        %238 = vmatmul.f32.gmra.mxu0 %v205
        %v239 = vpop.f32.mrf.mxu0
        %v240 = vadd.f32 0.0, %v239
        %241 = vmatmul.f32.gmra.mxu0 %v208
        %v242 = vpop.f32.mrf.mxu0
        %v243 = vadd.f32 0.0, %v242
        %244 = vmatmul.f32.gmra.mxu0 %v211
        %v245 = vpop.f32.mrf.mxu0
        %v246 = vadd.f32 0.0, %v245
        %247 = vdwg.mxu0
        %v248 = vld [vmem:[#allocation2] sm:$0xff]
        %v249 = vld [vmem:[#allocation2 + $0x8] sm:$0xff]
        %v250 = vld [vmem:[#allocation2 + $0x10] sm:$0xff]
        %v251 = vld [vmem:[#allocation2 + $0x18] sm:$0xff]
        %s252 = scalar_lea.vmem [#allocation2], 32
        %v253 = vld [vmem:[%s252] sm:$0xff]
        %v254 = vld [vmem:[%s252 + $0x8] sm:$0xff]
        %v255 = vld [vmem:[%s252 + $0x10] sm:$0xff]
        %v256 = vld [vmem:[%s252 + $0x18] sm:$0xff]
        %vm257 = vcmask 261120
        %v259 = vsel %vm257, %v237, 0
        %v262 = vsel %vm257, %v240, 0
        %264 = vmatpush.msra.mxu0 0.0
        %265 = vmatpush.msra.mxu0 0.0
        %266 = vmatpush.msra.mxu0 0.0
        %267 = vmatpush.msra.mxu0 0.0
        %268 = vmatpush.msra.mxu0 0.0
        %269 = vmatpush.msra.mxu0 0.0
        %270 = vmatpush.msra.mxu0 0.0
        %271 = vmatpush.msra.mxu0 0.0
        %272 = vmatpush.msra.mxu0 0.0
        %273 = vmatpush.msra.mxu0 0.0
        %274 = vmatpush.msra.mxu0 0.0
        %275 = vmatpush.msra.mxu0 0.0
        %276 = vmatpush.msra.mxu0 %v256
        %277 = vmatpush.msra.mxu0 %v255
        %278 = vmatpush.msra.mxu0 %v254
        %279 = vmatpush.msra.mxu0 %v253
        %280 = vmatmul.f32.gmra.mxu0 %v259
        %v281 = vpop.f32.mrf.mxu0
        %v282 = vadd.f32 0.0, %v281
        %283 = vmatmul.f32.gmra.mxu0 %v262
        %v284 = vpop.f32.mrf.mxu0
        %v285 = vadd.f32 0.0, %v284
        %286 = vdwg.mxu0
        %v288 = vsel %vm257, %v231, 0
        %v291 = vsel %vm257, %v234, 0
        %293 = vmatpush.msra.mxu0 0.0
        %294 = vmatpush.msra.mxu0 0.0
        %295 = vmatpush.msra.mxu0 0.0
        %296 = vmatpush.msra.mxu0 0.0
        %297 = vmatpush.msra.mxu0 0.0
        %298 = vmatpush.msra.mxu0 0.0
        %299 = vmatpush.msra.mxu0 0.0
        %300 = vmatpush.msra.mxu0 0.0
        %301 = vmatpush.msra.mxu0 0.0
        %302 = vmatpush.msra.mxu0 0.0
        %303 = vmatpush.msra.mxu0 0.0
        %304 = vmatpush.msra.mxu0 0.0
        %305 = vmatpush.msra.mxu0 %v251
        %306 = vmatpush.msra.mxu0 %v250
        %307 = vmatpush.msra.mxu0 %v249
        %308 = vmatpush.msra.mxu0 %v248
        %309 = vmatmul.f32.gmra.mxu0 %v288
        %v310 = vpop.f32.mrf.mxu0
        %v311 = vadd.f32 %v282, %v310
        %312 = vmatmul.f32.gmra.mxu0 %v291
        %v313 = vpop.f32.mrf.mxu0
        %v314 = vadd.f32 %v285, %v313
        %315 = vdwg.mxu0
        %s316 = scalar_lea.vmem [#allocation2], 64
        %v317 = vld [vmem:[%s316] sm:$0xff]
        %v318 = vld [vmem:[%s316 + $0x8] sm:$0xff]
        %v319 = vld [vmem:[%s316 + $0x10] sm:$0xff]
        %v320 = vld [vmem:[%s316 + $0x18] sm:$0xff]
        %v322 = vsel %vm257, %v243, 0
        %v325 = vsel %vm257, %v246, 0
        %327 = vmatpush.msra.mxu0 0.0
        %328 = vmatpush.msra.mxu0 0.0
        %329 = vmatpush.msra.mxu0 0.0
        %330 = vmatpush.msra.mxu0 0.0
        %331 = vmatpush.msra.mxu0 0.0
        %332 = vmatpush.msra.mxu0 0.0
        %333 = vmatpush.msra.mxu0 0.0
        %334 = vmatpush.msra.mxu0 0.0
        %335 = vmatpush.msra.mxu0 0.0
        %336 = vmatpush.msra.mxu0 0.0
        %337 = vmatpush.msra.mxu0 0.0
        %338 = vmatpush.msra.mxu0 0.0
        %339 = vmatpush.msra.mxu0 %v320
        %340 = vmatpush.msra.mxu0 %v319
        %341 = vmatpush.msra.mxu0 %v318
        %342 = vmatpush.msra.mxu0 %v317
        %343 = vmatmul.f32.gmra.mxu0 %v322
        %v344 = vpop.f32.mrf.mxu0
        %v345 = vadd.f32 0.0, %v344
        %346 = vmatmul.f32.gmra.mxu0 %v325
        %v347 = vpop.f32.mrf.mxu0
        %v348 = vadd.f32 0.0, %v347
        %349 = vdwg.mxu0
        %v350 = vadd.f32 %v311, %v345
        %v351 = vadd.f32 %v314, %v348
        %v352 = vmax.f32 %v350, 0.0
        %v353 = vmax.f32 %v351, 0.0
        %vm354 = vcmask 523264
        %355 = vst.msk [vmem:[%s180] sm:$0xff] %vm354, %v352
        %356 = vst.msk [vmem:[%s180 + $0x8] sm:$0xff] %vm354, %v353
        %s357 = sand.u32 %s94, 1
        %s358 = scalar_lea.sflag [#allocation4], %s357
        %s359 = sand.u32 %s94, 1
        %s360 = smul.addr %s359, 16
        %s361 = scalar_lea.vmem [#allocation5], %s360
        // Predicated region
        $region37: #{tpu_custom_call.1} parent=31 // pred_check
          %p362 = pneg %p104
        $region38: #{tpu_custom_call.1} parent=31 // pred_check_branch
          %364 = sbr.rel (%p362) target = $region40
        $region39: #{tpu_custom_call.1} parent=31 // pred_region
          %366 = vsyncadd %s358, 0
          %s367 = smul.addr %s18, 2
          %s368 = smul.addr %s367, 8
          %s369 = scalar_lea.hbm %s3, %s368
          %s370 = sshll.u32 %s361, 4
          %s371 = int_to_ptr.vmem [resolvable:$true] %s370
          %s372 = sshll.u32 %s369, 4
          %s373 = int_to_ptr.hbm [resolvable:$true] %s372
          %378 = dma.vmem_to_hbm [thread:$0]  %s371, 256, %s373, %s358, 128, 128, 8
        $region40: #{tpu_custom_call.1} parent=31 // pred_fallthru
          _
      $region32: #{tpu_custom_call.1} parent=5 // pred_fallthru
        _
      %p379 = scmp.le.s32.totalorder 2, %s13
      // Predicated region
      $region41: #{tpu_custom_call.1} parent=5 // pred_check
        %p380 = pneg %p379
      $region42: #{tpu_custom_call.1} parent=5 // pred_check_branch
        %382 = sbr.rel (%p380) target = $region44
      $region43: #{tpu_custom_call.1} parent=5 // pred_region
        %s383 = ssub.s32 %s13, 2
        // Predicated region
        $region45: #{tpu_custom_call.1} parent=43 // pred_check
          %p384 = pneg %p110
        $region46: #{tpu_custom_call.1} parent=43 // pred_check_branch
          %386 = sbr.rel (%p384) target = $region48
        $region47: #{tpu_custom_call.1} parent=43 // pred_region
          %s387 = sand.u32 %s95, 1
          %s388 = scalar_lea.sflag [#allocation4], %s387
          %s389 = sand.u32 %s95, 1
          %s390 = smul.addr %s389, 16
          %s391 = scalar_lea.vmem [#allocation5], %s390
          %393 = dma.done %s388, 256
        $region48: #{tpu_custom_call.1} parent=43 // pred_fallthru
          _
      $region44: #{tpu_custom_call.1} parent=5 // pred_fallthru
        _
    $region6: #{tpu_custom_call.1} parent=1 // loop_footer
      %s17 = sadd.s32 1, %s13
    $region7: #{tpu_custom_call.1} parent=1 // loop_footer_branch
      %12 = sbr.rel target = $region3
    $region8: #{tpu_custom_call.1} parent=1 // loop_exit
      _
    %394 = vsyncpa [#allocation3], 1
    %s395 = scalar_lea.sflag [#allocation3], 1
    %396 = vsyncpa %s395, 1
    %397 = vsyncpa [#allocation4], 1
    %s398 = scalar_lea.sflag [#allocation4], 1
    %399 = vsyncpa %s398, 1

</llo_original>
